<compile_context>
chip_gen: v5e
topology: v5e:2x2
jax: 0.10.0
libtpu: 0.0.40
codegen_flags: <defaults>
</compile_context>

<pallas_src>
from collections import OrderedDict, namedtuple
import functools

import numpy as np
import jax
import jax.numpy as jnp
from jax.experimental import pallas as pl
from jax.experimental.pallas import tpu as pltpu


def _batch_axis_semantics():
    """v7x: shard the batch grid axis across the two TensorCores; else 'parallel'."""
    try:
        kind = jax.devices()[0].device_kind.lower()
    except Exception:  # pragma: no cover - defensive
        kind = ""
    if "v7" in kind:
        return getattr(pltpu, "CORE_PARALLEL", "parallel")
    return "parallel"


# ----------------------------------------------------------------------------
# Pallas kernel: the whole task graph for one batch element, one HBM pass.
#
#   cols  = in-kernel im2col of the flattened padded image   (9*Cin, H*W)
#   head  = relu(W_heads @ cols + b_heads)    # both task heads, gains folded
#   fused = relu(W_fuse  @ head + b_fuse)     # funnel (concat + 1x1 conv)
#
# Layout: pixels live in the lane dimension (H*W >= 128), so the matmul RHS,
# the intermediate and the output store are all lane-dense.
# ----------------------------------------------------------------------------
def _fused_graph_kernel(xq_ref, edge_ref, wh_ref, bh_ref, wf_ref, bf_ref, o_ref,
                        *, width, hw):
    # xq_ref  : (Cin, Mq)  bf16  H-padded, flattened image, +1 zero col each end
    # edge_ref: (2, Mq)    bf16  0/1 keep-masks for left/right conv taps
    # wh_ref  : (2*Cmid, 9*Cin)  stacked head weights (per-task gains folded in)
    # bh_ref  : (2*Cmid, 1) f32  folded head bias
    # wf_ref  : (Cout, 2*Cmid)   funnel 1x1 weights
    # bf_ref  : (Cout, 1)   f32  funnel bias
    # o_ref   : (Cout, H*W)      output tile (lane-dense)
    x_mid = xq_ref[...]
    # In-kernel im2col: tap (kh, kw) of output pixel m is xq[m + kh*W + kw].
    # Taps with kw != 1 would read across a row boundary at the left/right
    # image edge; those source columns are zeroed via the precomputed masks.
    x_l = x_mid * edge_ref[0:1, :]          # source for all kw == 0 taps
    x_r = x_mid * edge_ref[1:2, :]          # source for all kw == 2 taps
    srcs = (x_l, x_mid, x_r)

    views = []
    for kh in range(3):
        for kw in range(3):
            off = kh * width + kw
            views.append(srcs[kw][:, off:off + hw])       # (Cin, H*W) static slice
    cols = jnp.concatenate(views, axis=0)                 # (9*Cin, H*W), stays in VMEM

    # ONE matmul over the full K = 9*Cin contraction (not 9 small K=Cin matmuls).
    head = jnp.dot(wh_ref[...], cols, preferred_element_type=jnp.float32)
    head = jnp.maximum(head + bh_ref[...], 0.0)           # both task heads + ReLU

    fused = jnp.dot(wf_ref[...], head.astype(wf_ref.dtype),
                    preferred_element_type=jnp.float32)   # funnel: concat + 1x1 conv
    o_ref[...] = jnp.maximum(fused + bf_ref[...], 0.0).astype(o_ref.dtype)


# ----------------------------------------------------------------------------
# Wrapper: minimal host-side prep (one pad+flatten+cast pass) + pallas_call.
# ----------------------------------------------------------------------------
def _fused_forward(img_nchw, w_heads_T, b_heads_col, w_fuse_T, b_fuse_col,
                   *, compute_dtype, out_dtype, batch_semantics):
    B, Cin, H, W = img_nchw.shape
    Ch, K = w_heads_T.shape                 # (2*Cmid, 9*Cin)
    Cout = w_fuse_T.shape[0]
    HW = H * W
    assert K == 9 * Cin

    # Single cheap host pass over the raw image (no 9x im2col inflation):
    #   pad H by 1 row each side, flatten HW (free), add 1 zero column at each
    #   end so every conv tap is a plain positive lane offset, cast to bf16.
    xp = jnp.pad(img_nchw, ((0, 0), (0, 0), (1, 1), (0, 0)))          # (B,Cin,H+2,W)
    xq = jnp.pad(xp.reshape(B, Cin, (H + 2) * W),
                 ((0, 0), (0, 0), (1, 1))).astype(compute_dtype)      # (B,Cin,Mq)
    Mq = xq.shape[-1]                                                 # (H+2)*W + 2

    # 0/1 keep-masks over source lanes: element p of xq holds padded-image
    # column (p-1) mod W.  kw=0 taps must never read column W-1; kw=2 taps must
    # never read column 0 (those reads are the 'same'-padding zeros).
    col = (np.arange(Mq) - 1) % W
    edge = jnp.asarray(
        np.stack([(col != W - 1), (col != 0)]).astype(np.float32)
    ).astype(compute_dtype)                                           # (2, Mq)

    kernel = functools.partial(_fused_graph_kernel, width=W, hw=HW)

    flops = 2 * B * HW * (K * Ch + Ch * Cout)
    bytes_accessed = (xq.size * xq.dtype.itemsize
                      + edge.size * edge.dtype.itemsize
                      + (Ch * K + Cout * Ch) * 2 + (Ch + Cout) * 4
                      + B * Cout * HW * jnp.dtype(out_dtype).itemsize)

    # TODO(synk): for large H*W (>~50k pixels/image) add an M-tile grid axis
    # with a manual-DMA halo window (memory_space=pl.ANY + make_async_copy) so
    # the in-VMEM (9*Cin, tile) slab stays small, and set vmem_limit_bytes
    # explicitly (v7x: 32 MiB scoped / 64 MiB physical, v5e: 16 MiB scoped).
    # At these sizes the full per-batch spatial extent is the right (largest)
    # tile and per-step overhead is minimal.
    out = pl.pallas_call(
        kernel,
        out_shape=jax.ShapeDtypeStruct((B, Cout, HW), out_dtype),
        grid=(B,),
        in_specs=[
            pl.BlockSpec((None, Cin, Mq), lambda b: (b, 0, 0)),   # per-batch image
            pl.BlockSpec((2, Mq), lambda b: (0, 0)),              # edge keep-masks
            pl.BlockSpec((Ch, K), lambda b: (0, 0)),              # stacked head weights
            pl.BlockSpec((Ch, 1), lambda b: (0, 0)),              # folded head bias (f32)
            pl.BlockSpec((Cout, Ch), lambda b: (0, 0)),           # funnel weights
            pl.BlockSpec((Cout, 1), lambda b: (0, 0)),            # funnel bias (f32)
        ],
        out_specs=pl.BlockSpec((None, Cout, HW), lambda b: (b, 0, 0)),
        compiler_params=pltpu.CompilerParams(
            dimension_semantics=(batch_semantics,)),
        cost_estimate=pl.CostEstimate(flops=flops, transcendentals=0,
                                      bytes_accessed=int(bytes_accessed)),
    )(xq, edge,
      w_heads_T.astype(compute_dtype), b_heads_col,
      w_fuse_T.astype(compute_dtype), b_fuse_col)

    # (B, Cout, H*W) -> (B, Cout, H, W): splits the last dim only -> free reshape.
    return out.reshape(B, Cout, H, W)


# ----------------------------------------------------------------------------
# The MultitaskGraphModel forward (graph orchestration is plain Python glue)
# ----------------------------------------------------------------------------
class MultitaskGraphModelPallas:
    """Concrete MultitaskGraphModel: two conv task heads + one funnel module."""

    def __init__(self, key, cin=4, cmid=8, cout=8,
                 compute_dtype=jnp.bfloat16, out_dtype=jnp.bfloat16):
        ks = jax.random.split(key, 6)
        scale = 0.1
        # task "person" head: Conv3x3(cin->cmid)
        self.w_person = scale * jax.random.normal(ks[0], (3, 3, cin, cmid), jnp.float32)
        self.b_person = scale * jax.random.normal(ks[1], (cmid,), jnp.float32)
        # task "vehicle" head: Conv3x3(cin->cmid)
        self.w_vehicle = scale * jax.random.normal(ks[2], (3, 3, cin, cmid), jnp.float32)
        self.b_vehicle = scale * jax.random.normal(ks[3], (cmid,), jnp.float32)
        # funnel: 1x1 Conv(2*cmid -> cout) on channel-concat
        self.w_fuse = scale * jax.random.normal(ks[4], (2 * cmid, cout), jnp.float32)
        self.b_fuse = scale * jax.random.normal(ks[5], (cout,), jnp.float32)
        # per-task extra inputs (task_inputs in the reference cfg)
        self.task_inputs = {
            "person": {"gain": jnp.array([1.0], jnp.float32)},
            "vehicle": {"gain": jnp.array([2.0], jnp.float32)},
        }
        self.compute_dtype = compute_dtype
        self.out_dtype = out_dtype
        self._output_names = ["fused"]

        # ---- "graph tracing" done once at init (mirrors trace + node merge):
        # fold each per-task gain into that head's weights/bias
        # (relu(g*(conv(x,w)+b)) == relu(conv(x,g*w)+g*b), valid for g >= 0),
        # stack both heads into one (9*Cin, 2*Cmid) matmul, and pre-transpose to
        # the channels-major layout the fused kernel consumes.
        gp = self.task_inputs["person"]["gain"][0]
        gv = self.task_inputs["vehicle"]["gain"][0]
        assert float(gp) >= 0.0 and float(gv) >= 0.0, \
            "gain folding through ReLU requires non-negative per-task gains"
        wp = (gp * self.w_person).reshape(9 * cin, cmid)          # (kh,kw,cin) flatten
        wv = (gv * self.w_vehicle).reshape(9 * cin, cmid)
        self._w_heads_T = jnp.concatenate([wp, wv], axis=1).T     # (2*cmid, 9*cin)
        self._b_heads_col = jnp.concatenate(
            [gp * self.b_person, gv * self.b_vehicle]).reshape(2 * cmid, 1)
        self._w_fuse_T = self.w_fuse.T                            # (cout, 2*cmid)
        self._b_fuse_col = self.b_fuse.reshape(cout, 1)

        self._forward_fused = jax.jit(functools.partial(
            _fused_forward,
            compute_dtype=compute_dtype,
            out_dtype=out_dtype,
            batch_semantics=_batch_axis_semantics()))

    @property
    def output_names(self):
        return self._output_names

    def forward(self, inputs, out_names=None):
        assert isinstance(inputs, dict)
        img = inputs["img"]                                       # NCHW
        # --- traced-graph execution: both task modules + funnel in ONE kernel.
        # The funnel pops "person"/"vehicle", so only "fused" is a graph output
        # and the per-task activations legitimately never leave the chip.
        tmp_outputs = OrderedDict()
        tmp_outputs["fused"] = self._forward_fused(
            img, self._w_heads_T, self._b_heads_col,
            self._w_fuse_T, self._b_fuse_col)

        if out_names is None:
            out_names = self._output_names
        else:
            out_names = sorted([out_names] if isinstance(out_names, str) else list(out_names))
            for n in out_names:
                assert n in self._output_names

        results = OrderedDict((n, tmp_outputs[n]) for n in out_names)
        # flatten_outputs=True: tuple of namedtuples, one per output name
        outs = []
        for name, res in results.items():
            OrderedOutput = namedtuple("OrderedOutput", [name])
            outs.append(OrderedOutput(**{name: res}))
        return tuple(outs)

    __call__ = forward


# ----------------------------------------------------------------------------
# Pure-JAX reference for verification (same gain fold + bf16 operand rounding,
# f32 accumulation in both paths, so comparisons are apples-to-apples).
# ----------------------------------------------------------------------------
def _ref_forward(model, img):
    cdt = model.compute_dtype
    img_c = img.astype(cdt)

    def head(w, b, g):
        w_folded = (g[0] * w).astype(cdt)                         # same fold + cast as kernel
        y = jax.lax.conv_general_dilated(
            img_c, w_folded, window_strides=(1, 1), padding="SAME",
            dimension_numbers=("NCHW", "HWIO", "NCHW"),
            preferred_element_type=jnp.float32)
        return jnp.maximum(y + (g[0] * b)[None, :, None, None], 0.0)

    p = head(model.w_person, model.b_person, model.task_inputs["person"]["gain"])
    v = head(model.w_vehicle, model.b_vehicle, model.task_inputs["vehicle"]["gain"])
    cat = jnp.concatenate([p, v], axis=1).astype(cdt)             # (B, 2*Cmid, H, W)
    w1x1 = model.w_fuse.T[:, :, None, None].astype(cdt)           # OIHW (Cout, 2*Cmid, 1, 1)
    y = jax.lax.conv_general_dilated(
        cat, w1x1, window_strides=(1, 1), padding="VALID",
        dimension_numbers=("NCHW", "OIHW", "NCHW"),
        preferred_element_type=jnp.float32)
    return jnp.maximum(y + model.b_fuse[None, :, None, None], 0.0)


if __name__ == "__main__":
    key = jax.random.PRNGKey(0)
    k_model, k_img = jax.random.split(key)

    img = jax.random.normal(k_img, (2, 4, 16, 16), jnp.float32)   # NCHW, B=2, C=4, H=W=16
    inputs = {"img": img}

    # Perf-default model: bf16 kernel output (halves output HBM bytes).
    model = MultitaskGraphModelPallas(k_model)
    outs = model(inputs, out_names=["fused"])
    fused = outs[0].fused
    jax.block_until_ready(fused)
    assert fused.shape == (2, 8, 16, 16), fused.shape
    assert fused.dtype == jnp.bfloat16, fused.dtype

    ref = _ref_forward(model, img)
    jax.block_until_ready(ref)
    fused_f32 = fused.astype(jnp.float32)
    err_bf16 = float(jnp.max(jnp.abs(fused_f32 - ref)))
    assert jnp.allclose(fused_f32, ref, atol=2e-2, rtol=2e-2), \
        f"bf16-output mismatch vs JAX reference, max|err|={err_bf16}"

    # Strict-parity check: same weights, f32 kernel output (tighter tolerance).
    model_f32 = MultitaskGraphModelPallas(k_model, out_dtype=jnp.float32)
    fused32 = model_f32(inputs)[0].fused
    jax.block_until_ready(fused32)
    err_f32 = float(jnp.max(jnp.abs(fused32 - ref)))
    assert fused32.dtype == jnp.float32
    assert fused32.shape == (2, 8, 16, 16)
    assert jnp.allclose(fused32, ref, atol=5e-3, rtol=5e-3), \
        f"f32-output mismatch vs JAX reference, max|err|={err_f32}"

    print("KERNEL_OK")
</pallas_src>

<mosaic_0001>
module attributes {stable_mosaic.version = 11 : i64} {
  func.func @_fused_graph_kernel(%arg0: i32, %arg1: memref<1x4x290xbf16, #tpu.memory_space<vmem>>, %arg2: memref<2x290xbf16, #tpu.memory_space<vmem>>, %arg3: memref<16x36xbf16, #tpu.memory_space<vmem>>, %arg4: memref<16x1xf32, #tpu.memory_space<vmem>>, %arg5: memref<8x16xbf16, #tpu.memory_space<vmem>>, %arg6: memref<8x1xf32, #tpu.memory_space<vmem>>, %arg7: memref<1x8x256xbf16, #tpu.memory_space<vmem>>) attributes {dimension_semantics = [#tpu.dimension_semantics<parallel>], iteration_bounds = array<i64: 2>, scalar_prefetch = 0 : i64, scratch_operands = 0 : i64, tpu.core_type = #tpu.core_type<tc>, window_params = [{transform_indices = @transform_0, window_bounds = array<i64: 1, 4, 290>}, {pipeline_mode = #tpu.pipeline_mode<synchronous>, transform_indices = @transform_1, window_bounds = array<i64: 2, 290>}, {pipeline_mode = #tpu.pipeline_mode<synchronous>, transform_indices = @transform_2, window_bounds = array<i64: 16, 36>}, {pipeline_mode = #tpu.pipeline_mode<synchronous>, transform_indices = @transform_3, window_bounds = array<i64: 16, 1>}, {pipeline_mode = #tpu.pipeline_mode<synchronous>, transform_indices = @transform_4, window_bounds = array<i64: 8, 16>}, {pipeline_mode = #tpu.pipeline_mode<synchronous>, transform_indices = @transform_5, window_bounds = array<i64: 8, 1>}, {transform_indices = @transform_6, window_bounds = array<i64: 1, 8, 256>}]} {
    %c0 = arith.constant 0 : index
    %c0_0 = arith.constant 0 : index
    %c0_1 = arith.constant 0 : index
    %0 = vector.load %arg1[%c0, %c0_0, %c0_1] : memref<1x4x290xbf16, #tpu.memory_space<vmem>>, vector<1x4x290xbf16>
    %1 = vector.shape_cast %0 : vector<1x4x290xbf16> to vector<4x290xbf16>
    %c0_2 = arith.constant 0 : index
    %c0_3 = arith.constant 0 : index
    %2 = vector.load %arg2[%c0_2, %c0_3] : memref<2x290xbf16, #tpu.memory_space<vmem>>, vector<1x290xbf16>
    %3 = vector.broadcast %2 : vector<1x290xbf16> to vector<4x290xbf16>
    %4 = arith.mulf %1, %3 : vector<4x290xbf16>
    %c1 = arith.constant 1 : index
    %c0_4 = arith.constant 0 : index
    %5 = vector.load %arg2[%c1, %c0_4] : memref<2x290xbf16, #tpu.memory_space<vmem>>, vector<1x290xbf16>
    %6 = vector.broadcast %5 : vector<1x290xbf16> to vector<4x290xbf16>
    %7 = arith.mulf %1, %6 : vector<4x290xbf16>
    %8 = vector.extract_strided_slice %4 {offsets = [0, 0], sizes = [4, 256], strides = [1, 1]} : vector<4x290xbf16> to vector<4x256xbf16>
    %9 = vector.extract_strided_slice %1 {offsets = [0, 1], sizes = [4, 256], strides = [1, 1]} : vector<4x290xbf16> to vector<4x256xbf16>
    %10 = vector.extract_strided_slice %7 {offsets = [0, 2], sizes = [4, 256], strides = [1, 1]} : vector<4x290xbf16> to vector<4x256xbf16>
    %11 = vector.extract_strided_slice %4 {offsets = [0, 16], sizes = [4, 256], strides = [1, 1]} : vector<4x290xbf16> to vector<4x256xbf16>
    %12 = vector.extract_strided_slice %1 {offsets = [0, 17], sizes = [4, 256], strides = [1, 1]} : vector<4x290xbf16> to vector<4x256xbf16>
    %13 = vector.extract_strided_slice %7 {offsets = [0, 18], sizes = [4, 256], strides = [1, 1]} : vector<4x290xbf16> to vector<4x256xbf16>
    %14 = vector.extract_strided_slice %4 {offsets = [0, 32], sizes = [4, 256], strides = [1, 1]} : vector<4x290xbf16> to vector<4x256xbf16>
    %15 = vector.extract_strided_slice %1 {offsets = [0, 33], sizes = [4, 256], strides = [1, 1]} : vector<4x290xbf16> to vector<4x256xbf16>
    %16 = vector.extract_strided_slice %7 {offsets = [0, 34], sizes = [4, 256], strides = [1, 1]} : vector<4x290xbf16> to vector<4x256xbf16>
    %17 = tpu.concatenate %8, %9, %10, %11, %12, %13, %14, %15, %16 in 0 : vector<4x256xbf16>, vector<4x256xbf16>, vector<4x256xbf16>, vector<4x256xbf16>, vector<4x256xbf16>, vector<4x256xbf16>, vector<4x256xbf16>, vector<4x256xbf16>, vector<4x256xbf16> -> vector<36x256xbf16>
    %c0_5 = arith.constant 0 : index
    %c0_6 = arith.constant 0 : index
    %18 = vector.load %arg3[%c0_5, %c0_6] : memref<16x36xbf16, #tpu.memory_space<vmem>>, vector<16x36xbf16>
    %cst = arith.constant dense<0.000000e+00> : vector<16x256xf32>
    %19 = tpu.matmul %18, %17, %cst {dimension_numbers = #tpu.dot_dimension_numbers<[1], [0], [0], [1], [0, 0, 1, 1], [], []>} : vector<16x36xbf16>, vector<36x256xbf16>, vector<16x256xf32> -> vector<16x256xf32>
    %c0_7 = arith.constant 0 : index
    %c0_8 = arith.constant 0 : index
    %20 = vector.load %arg4[%c0_7, %c0_8] : memref<16x1xf32, #tpu.memory_space<vmem>>, vector<16x1xf32>
    %21 = vector.broadcast %20 : vector<16x1xf32> to vector<16x256xf32>
    %22 = arith.addf %19, %21 : vector<16x256xf32>
    %cst_9 = arith.constant 0.000000e+00 : f32
    %23 = vector.broadcast %cst_9 : f32 to vector<16x256xf32>
    %24 = arith.maximumf %22, %23 : vector<16x256xf32>
    %c0_10 = arith.constant 0 : index
    %c0_11 = arith.constant 0 : index
    %25 = vector.load %arg5[%c0_10, %c0_11] : memref<8x16xbf16, #tpu.memory_space<vmem>>, vector<8x16xbf16>
    %26 = arith.truncf %24 : vector<16x256xf32> to vector<16x256xbf16>
    %cst_12 = arith.constant dense<0.000000e+00> : vector<8x256xf32>
    %27 = tpu.matmul %25, %26, %cst_12 {dimension_numbers = #tpu.dot_dimension_numbers<[1], [0], [0], [1], [0, 0, 1, 1], [], []>} : vector<8x16xbf16>, vector<16x256xbf16>, vector<8x256xf32> -> vector<8x256xf32>
    %c0_13 = arith.constant 0 : index
    %c0_14 = arith.constant 0 : index
    %28 = vector.load %arg6[%c0_13, %c0_14] : memref<8x1xf32, #tpu.memory_space<vmem>>, vector<8x1xf32>
    %29 = vector.broadcast %28 : vector<8x1xf32> to vector<8x256xf32>
    %30 = arith.addf %27, %29 : vector<8x256xf32>
    %cst_15 = arith.constant 0.000000e+00 : f32
    %31 = vector.broadcast %cst_15 : f32 to vector<8x256xf32>
    %32 = arith.maximumf %30, %31 : vector<8x256xf32>
    %33 = arith.truncf %32 : vector<8x256xf32> to vector<8x256xbf16>
    %c0_16 = arith.constant 0 : index
    %c0_17 = arith.constant 0 : index
    %c0_18 = arith.constant 0 : index
    %34 = vector.load %arg7[%c0_16, %c0_17, %c0_18] : memref<1x8x256xbf16, #tpu.memory_space<vmem>>, vector<1x8x256xbf16>
    %35 = vector.shape_cast %34 : vector<1x8x256xbf16> to vector<8x256xbf16>
    %36 = vector.shape_cast %33 : vector<8x256xbf16> to vector<1x8x256xbf16>
    tpu.vector_store %arg7[%c0_16, %c0_17, %c0_18], %36 {strides = array<i32>} : memref<1x8x256xbf16, #tpu.memory_space<vmem>>, vector<1x8x256xbf16>,
    return
  }
  func.func @transform_0(%arg0: i32) -> (i32, i32, i32) {
    %c0_i32 = arith.constant 0 : i32
    %c0_i32_0 = arith.constant 0 : i32
    %c0_i32_1 = arith.constant 0 : i32
    return %arg0, %c0_i32, %c0_i32_0 : i32, i32, i32
  }
  func.func @transform_1(%arg0: i32) -> (i32, i32) {
    %c0_i32 = arith.constant 0 : i32
    %c0_i32_0 = arith.constant 0 : i32
    %c0_i32_1 = arith.constant 0 : i32
    return %c0_i32, %c0_i32_0 : i32, i32
  }
  func.func @transform_2(%arg0: i32) -> (i32, i32) {
    %c0_i32 = arith.constant 0 : i32
    %c0_i32_0 = arith.constant 0 : i32
    %c0_i32_1 = arith.constant 0 : i32
    return %c0_i32, %c0_i32_0 : i32, i32
  }
  func.func @transform_3(%arg0: i32) -> (i32, i32) {
    %c0_i32 = arith.constant 0 : i32
    %c0_i32_0 = arith.constant 0 : i32
    %c0_i32_1 = arith.constant 0 : i32
    return %c0_i32, %c0_i32_0 : i32, i32
  }
  func.func @transform_4(%arg0: i32) -> (i32, i32) {
    %c0_i32 = arith.constant 0 : i32
    %c0_i32_0 = arith.constant 0 : i32
    %c0_i32_1 = arith.constant 0 : i32
    return %c0_i32, %c0_i32_0 : i32, i32
  }
  func.func @transform_5(%arg0: i32) -> (i32, i32) {
    %c0_i32 = arith.constant 0 : i32
    %c0_i32_0 = arith.constant 0 : i32
    %c0_i32_1 = arith.constant 0 : i32
    return %c0_i32, %c0_i32_0 : i32, i32
  }
  func.func @transform_6(%arg0: i32) -> (i32, i32, i32) {
    %c0_i32 = arith.constant 0 : i32
    %c0_i32_0 = arith.constant 0 : i32
    %c0_i32_1 = arith.constant 0 : i32
    return %arg0, %c0_i32, %c0_i32_0 : i32, i32, i32
  }
}

</mosaic_0001>

<llo_original>
// kernel: _fused_forward.1
$region0: #{_fused_forward.1}
  #allocation0 [shape = 'u32[]', space=smem, size = 0x4, offset = 0x4, fixed_abs, tag = 'smem constant byte address 0x4 - core index']
  #allocation1 [shape = 'u32[72,128]{1,0:T(1,128)}', space=vmem, size = 0x9000, scoped, tag = 'internal scratch']
  %s0 = inlined_call_operand.vmem [shape: bf16[2,4,290], index: 0, kind: input, shape index: {}]
  %s1 = inlined_call_operand.vmem [shape: bf16[2,290], index: 1, kind: input, shape index: {}]
  %s2 = inlined_call_operand.vmem [shape: bf16[16,36], index: 2, kind: input, shape index: {}]
  %s3 = inlined_call_operand.vmem [shape: f32[16,1], index: 3, kind: input, shape index: {}]
  %s4 = inlined_call_operand.vmem [shape: bf16[8,16], index: 4, kind: input, shape index: {}]
  %s5 = inlined_call_operand.vmem [shape: f32[8,1], index: 5, kind: input, shape index: {}]
  %s6 = inlined_call_operand.vmem [shape: bf16[2,8,256], index: 6, kind: output, shape index: {}]
  %s7 = sld [smem:[#allocation0]]
  $region57: #{_fused_forward.1} parent=0
    _
  %s9 = ssub.s32 1, %s7
  %s10 = scalar_select 0, %s9, %s7
  loop: start=0, step=1, limit=4
  $region2: #{_fused_forward.1} parent=0 // loop_pre_header
    _
  $region3: #{_fused_forward.1} parent=0 // loop_header
    %s12 = sphi 0, %s16
    %p13 = scmp.ge.s32.totalorder %s12, 4
    %s22 = sphi 0, %s24
    %s25 = sphi 0, %s22
    %s26 = sphi 0, %s25
    %s42 = sphi 0, %s26
    %s46 = sphi 0, %s46
    %s48 = sphi 0, %s46
    %s49 = sphi 0, %s48
    %s63 = sphi 0, %s49
    %s67 = sphi 0, %s67
    %s69 = sphi 0, %s67
    %s70 = sphi 0, %s69
    %s84 = sphi 0, %s70
    %s88 = sphi 0, %s88
    %s90 = sphi 0, %s88
    %s91 = sphi 0, %s90
    %s105 = sphi 0, %s91
    %s109 = sphi 0, %s109
    %s111 = sphi 0, %s109
    %s112 = sphi 0, %s111
    %s126 = sphi 0, %s112
    %s130 = sphi 0, %s130
    %s132 = sphi 0, %s130
    %s133 = sphi 0, %s132
    %s147 = sphi 0, %s133
    %s153 = sphi 0, %s155
    %s156 = sphi 0, %s153
    %s157 = sphi 0, %s156
    %s173 = sphi 0, %s157
  $region4: #{_fused_forward.1} parent=0 // loop_header_branch
    %15 = sbr.rel (%p13) target = $region8
  $region5: #{_fused_forward.1} parent=0 // loop_body
    %s17 = ssub.s32 %s12, 1
    %s18 = ssub.s32 %s12, 2
    %s19 = sadd.s32 %s12, 1
    %s20 = ssub.s32 %s12, %s19
    %p21 = scmp.eq.s32.totalorder %s20, 0
    %s23 = sadd.s32 %s22, 1
    %s24 = scalar_select %p21, %s22, %s23
    %p27 = pneg %p21
    %p28 = scmp.eq.s32.totalorder %s12, 1
    %p29 = por %p27, %p28
    %p30 = scmp.ne.s32.totalorder %s22, %s25
    %p31 = scmp.eq.s32.totalorder %s12, 0
    %p32 = por %p30, %p31
    %p33 = scmp.ne.s32.totalorder %s22, %s25
    %p34 = scmp.eq.s32.totalorder %s17, 1
    %p35 = por %p33, %p34
    %p36 = scmp.ne.s32.totalorder %s25, %s26
    %p37 = scmp.eq.s32.totalorder %s17, 0
    %p38 = por %p36, %p37
    %p39 = scmp.ne.s32.totalorder %s25, %s26
    %p40 = scmp.eq.s32.totalorder %s18, 1
    %p41 = por %p39, %p40
    %p43 = scmp.ne.s32.totalorder %s26, %s42
    %p44 = scmp.eq.s32.totalorder %s18, 0
    %p45 = por %p43, %p44
    %s47 = sadd.s32 %s46, 1
    %p50 = scmp.eq.s32.totalorder %s12, 1
    %p51 = scmp.ne.s32.totalorder %s46, %s48
    %p52 = scmp.eq.s32.totalorder %s12, 0
    %p53 = por %p51, %p52
    %p54 = scmp.ne.s32.totalorder %s46, %s48
    %p55 = scmp.eq.s32.totalorder %s17, 1
    %p56 = por %p54, %p55
    %p57 = scmp.ne.s32.totalorder %s48, %s49
    %p58 = scmp.eq.s32.totalorder %s17, 0
    %p59 = por %p57, %p58
    %p60 = scmp.ne.s32.totalorder %s48, %s49
    %p61 = scmp.eq.s32.totalorder %s18, 1
    %p62 = por %p60, %p61
    %p64 = scmp.ne.s32.totalorder %s49, %s63
    %p65 = scmp.eq.s32.totalorder %s18, 0
    %p66 = por %p64, %p65
    %s68 = sadd.s32 %s67, 1
    %p71 = scmp.eq.s32.totalorder %s12, 1
    %p72 = scmp.ne.s32.totalorder %s67, %s69
    %p73 = scmp.eq.s32.totalorder %s12, 0
    %p74 = por %p72, %p73
    %p75 = scmp.ne.s32.totalorder %s67, %s69
    %p76 = scmp.eq.s32.totalorder %s17, 1
    %p77 = por %p75, %p76
    %p78 = scmp.ne.s32.totalorder %s69, %s70
    %p79 = scmp.eq.s32.totalorder %s17, 0
    %p80 = por %p78, %p79
    %p81 = scmp.ne.s32.totalorder %s69, %s70
    %p82 = scmp.eq.s32.totalorder %s18, 1
    %p83 = por %p81, %p82
    %p85 = scmp.ne.s32.totalorder %s70, %s84
    %p86 = scmp.eq.s32.totalorder %s18, 0
    %p87 = por %p85, %p86
    %s89 = sadd.s32 %s88, 1
    %p92 = scmp.eq.s32.totalorder %s12, 1
    %p93 = scmp.ne.s32.totalorder %s88, %s90
    %p94 = scmp.eq.s32.totalorder %s12, 0
    %p95 = por %p93, %p94
    %p96 = scmp.ne.s32.totalorder %s88, %s90
    %p97 = scmp.eq.s32.totalorder %s17, 1
    %p98 = por %p96, %p97
    %p99 = scmp.ne.s32.totalorder %s90, %s91
    %p100 = scmp.eq.s32.totalorder %s17, 0
    %p101 = por %p99, %p100
    %p102 = scmp.ne.s32.totalorder %s90, %s91
    %p103 = scmp.eq.s32.totalorder %s18, 1
    %p104 = por %p102, %p103
    %p106 = scmp.ne.s32.totalorder %s91, %s105
    %p107 = scmp.eq.s32.totalorder %s18, 0
    %p108 = por %p106, %p107
    %s110 = sadd.s32 %s109, 1
    %p113 = scmp.eq.s32.totalorder %s12, 1
    %p114 = scmp.ne.s32.totalorder %s109, %s111
    %p115 = scmp.eq.s32.totalorder %s12, 0
    %p116 = por %p114, %p115
    %p117 = scmp.ne.s32.totalorder %s109, %s111
    %p118 = scmp.eq.s32.totalorder %s17, 1
    %p119 = por %p117, %p118
    %p120 = scmp.ne.s32.totalorder %s111, %s112
    %p121 = scmp.eq.s32.totalorder %s17, 0
    %p122 = por %p120, %p121
    %p123 = scmp.ne.s32.totalorder %s111, %s112
    %p124 = scmp.eq.s32.totalorder %s18, 1
    %p125 = por %p123, %p124
    %p127 = scmp.ne.s32.totalorder %s112, %s126
    %p128 = scmp.eq.s32.totalorder %s18, 0
    %p129 = por %p127, %p128
    %s131 = sadd.s32 %s130, 1
    %p134 = scmp.eq.s32.totalorder %s12, 1
    %p135 = scmp.ne.s32.totalorder %s130, %s132
    %p136 = scmp.eq.s32.totalorder %s12, 0
    %p137 = por %p135, %p136
    %p138 = scmp.ne.s32.totalorder %s130, %s132
    %p139 = scmp.eq.s32.totalorder %s17, 1
    %p140 = por %p138, %p139
    %p141 = scmp.ne.s32.totalorder %s132, %s133
    %p142 = scmp.eq.s32.totalorder %s17, 0
    %p143 = por %p141, %p142
    %p144 = scmp.ne.s32.totalorder %s132, %s133
    %p145 = scmp.eq.s32.totalorder %s18, 1
    %p146 = por %p144, %p145
    %p148 = scmp.ne.s32.totalorder %s133, %s147
    %p149 = scmp.eq.s32.totalorder %s18, 0
    %p150 = por %p148, %p149
    %s151 = ssub.s32 %s12, %s19
    %p152 = scmp.eq.s32.totalorder %s151, 0
    %s154 = sadd.s32 %s153, 1
    %s155 = scalar_select %p152, %s153, %s154
    %p158 = pneg %p152
    %p159 = scmp.eq.s32.totalorder %s12, 1
    %p160 = por %p158, %p159
    %p161 = scmp.ne.s32.totalorder %s153, %s156
    %p162 = scmp.eq.s32.totalorder %s12, 0
    %p163 = por %p161, %p162
    %p164 = scmp.ne.s32.totalorder %s153, %s156
    %p165 = scmp.eq.s32.totalorder %s17, 1
    %p166 = por %p164, %p165
    %p167 = scmp.ne.s32.totalorder %s156, %s157
    %p168 = scmp.eq.s32.totalorder %s17, 0
    %p169 = por %p167, %p168
    %p170 = scmp.ne.s32.totalorder %s156, %s157
    %p171 = scmp.eq.s32.totalorder %s18, 1
    %p172 = por %p170, %p171
    %p174 = scmp.ne.s32.totalorder %s157, %s173
    %p175 = scmp.eq.s32.totalorder %s18, 0
    %p176 = por %p174, %p175
    %p177 = scmp.le.s32.totalorder 1, %s12
    %p178 = scmp.lt.s32.totalorder %s12, 3
    %p179 = pnand %p177, %p178
    %p180 = pneg %p179
    // Predicated region
    $region9: #{_fused_forward.1} parent=5 // pred_check
      _
    $region10: #{_fused_forward.1} parent=5 // pred_check_branch
      %182 = sbr.rel (%p179) target = $region12
    $region11: #{_fused_forward.1} parent=5 // pred_region
      %s183 = ssub.s32 %s12, 1
      // Predicated region
      $region13: #{_fused_forward.1} parent=11 // pred_check
        %p184 = pneg %p59
      $region14: #{_fused_forward.1} parent=11 // pred_check_branch
        %186 = sbr.rel (%p184) target = $region16
      $region15: #{_fused_forward.1} parent=11 // pred_region
        _
      $region16: #{_fused_forward.1} parent=11 // pred_fallthru
        _
      // Predicated region
      $region17: #{_fused_forward.1} parent=11 // pred_check
        %p187 = pneg %p80
      $region18: #{_fused_forward.1} parent=11 // pred_check_branch
        %189 = sbr.rel (%p187) target = $region20
      $region19: #{_fused_forward.1} parent=11 // pred_region
        _
      $region20: #{_fused_forward.1} parent=11 // pred_fallthru
        _
      // Predicated region
      $region21: #{_fused_forward.1} parent=11 // pred_check
        %p190 = pneg %p101
      $region22: #{_fused_forward.1} parent=11 // pred_check_branch
        %192 = sbr.rel (%p190) target = $region24
      $region23: #{_fused_forward.1} parent=11 // pred_region
        _
      $region24: #{_fused_forward.1} parent=11 // pred_fallthru
        _
      // Predicated region
      $region25: #{_fused_forward.1} parent=11 // pred_check
        %p193 = pneg %p122
      $region26: #{_fused_forward.1} parent=11 // pred_check_branch
        %195 = sbr.rel (%p193) target = $region28
      $region27: #{_fused_forward.1} parent=11 // pred_region
        _
      $region28: #{_fused_forward.1} parent=11 // pred_fallthru
        _
      // Predicated region
      $region29: #{_fused_forward.1} parent=11 // pred_check
        %p196 = pneg %p143
      $region30: #{_fused_forward.1} parent=11 // pred_check_branch
        %198 = sbr.rel (%p196) target = $region32
      $region31: #{_fused_forward.1} parent=11 // pred_region
        _
      $region32: #{_fused_forward.1} parent=11 // pred_fallthru
        _
    $region12: #{_fused_forward.1} parent=5 // pred_fallthru
      _
    %p199 = scmp.lt.s32.totalorder %s12, 2
    // Predicated region
    $region33: #{_fused_forward.1} parent=5 // pred_check
      %p200 = pneg %p199
    $region34: #{_fused_forward.1} parent=5 // pred_check_branch
      %202 = sbr.rel (%p200) target = $region36
    $region35: #{_fused_forward.1} parent=5 // pred_region
      // Predicated region
      $region37: #{_fused_forward.1} parent=35 // pred_check
        %p203 = pneg %p32
      $region38: #{_fused_forward.1} parent=35 // pred_check_branch
        %205 = sbr.rel (%p203) target = $region40
      $region39: #{_fused_forward.1} parent=35 // pred_region
        %p206 = scmp.lt.s32.totalorder %s12, 1
        %s207 = scalar_select %p206, %s12, 1
        %s208 = smul.addr %s207, 3
        %s209 = smul.addr %s208, 2
        %s210 = scalar_lea.vmem %s0, %s209
      $region40: #{_fused_forward.1} parent=35 // pred_fallthru
        _
    $region36: #{_fused_forward.1} parent=5 // pred_fallthru
      _
    %p211 = scmp.le.s32.totalorder 1, %s12
    %p212 = scmp.lt.s32.totalorder %s12, 3
    %p213 = pnand %p211, %p212
    %p214 = pneg %p213
    // Predicated region
    $region41: #{_fused_forward.1} parent=5 // pred_check
      _
    $region42: #{_fused_forward.1} parent=5 // pred_check_branch
      %216 = sbr.rel (%p213) target = $region44
    $region43: #{_fused_forward.1} parent=5 // pred_region
      %s217 = ssub.s32 %s12, 1
      %p218 = scmp.lt.s32.totalorder %s17, 1
      %s219 = scalar_select %p218, %s17, 1
      %s220 = smul.addr %s219, 3
      %s221 = smul.addr %s220, 2
      %s222 = scalar_lea.vmem %s0, %s221
      %p223 = pneg %p38
      %p224 = pneg %p35
      %p225 = pneg %p59
      %p226 = pneg %p56
      %p227 = pneg %p80
      %p228 = pneg %p77
      %p229 = pneg %p101
      %p230 = pneg %p98
      %p231 = pneg %p122
      %p232 = pneg %p119
      %p233 = pneg %p143
      %p234 = pneg %p140
      %p235 = pneg %p169
      %p236 = pneg %p166
      %p237 = scmp.lt.s32.totalorder %s17, 1
      %s238 = scalar_select %p237, %s17, 1
      %s239 = smul.addr %s238, 2
      %s240 = smul.addr %s239, 4
      %s241 = scalar_lea.vmem %s6, %s240
      %p242 = scmp.lt.s32.totalorder %s17, 1
      %s243 = scalar_select %p242, %s17, 1
      %s244 = smul.addr %s243, 3
      %s245 = smul.addr %s244, 2
      %s246 = scalar_lea.vmem %s0, %s245
      %p247 = scmp.lt.s32.totalorder %s17, 1
      %s248 = scalar_select %p247, %s17, 1
      %s249 = smul.addr %s248, 2
      %s250 = smul.addr %s249, 4
      %s251 = scalar_lea.vmem %s6, %s250
      %v253 = vld [vmem:[%s246] sm:$0x3f]
      %v254 = vld [vmem:[%s1] sm:$0x7]
      %256 = vst [vmem:[#allocation1] ss:$9 sm:$0xff] %v254
      %v257 = vld [vmem:[#allocation1] sm:$0xff]
      %v258 = vld [vmem:[#allocation1 + $0x9] sm:$0xff]
      %v259 = vld [vmem:[#allocation1 + $0x12] sm:$0xff]
      %v260 = vpack.i.b16 %v257, %v257
      %v262 = vperm.slane %v260, 0
      %v263 = vpack.i.b16 %v258, %v258
      %v265 = vperm.slane %v263, 0
      %v266 = vpack.i.b16 %v259, %v259
      %v268 = vperm.slane %v266, 0
      %v269 = vunpack.c.l.bf16 %v253
      %v270 = vunpack.c.h.bf16 %v253
      %v271 = vunpack.c.l.bf16 %v262
      %v272 = vunpack.c.l.bf16 %v265
      %v273 = vunpack.c.l.bf16 %v268
      %v276 = vrot.slane %v272, 4
      %vm277 = vcmask 1043456
      %v278 = vsel %vm277, %v271, %v276
      %v280 = vmul.f32 %v269, %v278
      %v281 = vmul.f32 %v270, %v273
      %284 = vst [vmem:[#allocation1] ss:$2 sm:$0xff] %v280
      %s285 = scalar_lea.vmem [#allocation1], 16
      %286 = vst [vmem:[%s285] ss:$2 sm:$0xff] %v281
      %v287 = vld.sshfl [vmem:[#allocation1] sm:$0xff pattern:$0x75316420]
      %v288 = vld.sshfl [vmem:[#allocation1 + $0x8] sm:$0xff pattern:$0x75316420]
      %v289 = vld.sshfl [vmem:[#allocation1 + $0x10] sm:$0xff pattern:$0x75316420]
      %v293 = vpack.c.bf16 %v288, %v287
      %v294 = vpack.c.bf16 %v289, %v289
      %v295 = vld [vmem:[%s1] sm:$0x7]
      %297 = vst [vmem:[#allocation1] ss:$9 sm:$0xff] %v295
      %v298 = vld [vmem:[#allocation1] sm:$0xff]
      %v299 = vld [vmem:[#allocation1 + $0x9] sm:$0xff]
      %v300 = vld [vmem:[#allocation1 + $0x12] sm:$0xff]
      %v301 = vshrl.u32 %v298, 16
      %v302 = vpack.i.b16 %v301, %v301
      %v304 = vperm.slane %v302, 0
      %v305 = vshrl.u32 %v299, 16
      %v306 = vpack.i.b16 %v305, %v305
      %v308 = vperm.slane %v306, 0
      %v309 = vshrl.u32 %v300, 16
      %v310 = vpack.i.b16 %v309, %v309
      %v312 = vperm.slane %v310, 0
      %v313 = vunpack.c.l.bf16 %v304
      %v314 = vunpack.c.l.bf16 %v308
      %v315 = vunpack.c.l.bf16 %v312
      %v318 = vrot.slane %v314, 4
      %v319 = vsel %vm277, %v313, %v318
      %v321 = vmul.f32 %v269, %v319
      %v322 = vmul.f32 %v270, %v315
      %325 = vst [vmem:[#allocation1] ss:$2 sm:$0xff] %v321
      %s326 = scalar_lea.vmem [#allocation1], 16
      %327 = vst [vmem:[%s326] ss:$2 sm:$0xff] %v322
      %v328 = vld.sshfl [vmem:[#allocation1] sm:$0xff pattern:$0x75316420]
      %v329 = vld.sshfl [vmem:[#allocation1 + $0x8] sm:$0xff pattern:$0x75316420]
      %v330 = vld.sshfl [vmem:[#allocation1 + $0x10] sm:$0xff pattern:$0x75316420]
      %v334 = vpack.c.bf16 %v329, %v328
      %v335 = vpack.c.bf16 %v330, %v330
      %v337 = vunpack.c.l.b16 %v293
      %v338 = vunpack.c.h.b16 %v293
      %v339 = vpack.c.b16 %v337, %v337
      %v340 = vpack.c.b16 %v338, %v338
      %s342 = scalar_lea.vmem [#allocation1], 1
      %343 = vst [vmem:[%s342] ss:$4 sm:$0xff] %v253
      %v344 = vld.sshfl [vmem:[#allocation1] sm:$0xff pattern:$0x73625140]
      %v346 = vld.sshfl [vmem:[#allocation1 + $0x8] sm:$0xff pattern:$0x73625140]
      %v348 = vld.sshfl [vmem:[#allocation1 + $0x10] sm:$0xff pattern:$0x73625140]
      %350 = vrot.lane.b32.xlu0 %v344, 127
      %v351 = vpop.permute.xlu0 %350
      %352 = vrot.lane.b32.xlu0 %v346, 127
      %v353 = vpop.permute.xlu0 %352
      %354 = vrot.lane.b32.xlu0 %v348, 127
      %v355 = vpop.permute.xlu0 %354
      %vm356 = vcmask 1039360
      %v357 = vsel %vm356, %v351, %v353
      %v358 = vsel %vm356, %v353, %v355
      %v361 = vunpack.c.l.b16 %v334
      %v362 = vunpack.c.h.b16 %v334
      %v363 = vunpack.c.l.b16 %v335
      %v364 = vpack.c.b16 %v361, %v361
      %v365 = vpack.c.b16 %v362, %v362
      %v366 = vpack.c.b16 %v363, %v363
      %367 = vrot.lane.b32.xlu0 %v364, 126
      %v368 = vpop.permute.xlu0 %367
      %369 = vrot.lane.b32.xlu0 %v365, 126
      %v370 = vpop.permute.xlu0 %369
      %371 = vrot.lane.b32.xlu0 %v366, 126
      %v372 = vpop.permute.xlu0 %371
      %vm373 = vcmask 1031168
      %v374 = vsel %vm373, %v368, %v370
      %v375 = vsel %vm373, %v370, %v372
      %v377 = vunpack.c.l.b16 %v294
      %v378 = vpack.c.b16 %v377, %v377
      %v379 = vrot.slane %v339, 2
      %v380 = vrot.slane %v340, 2
      %v381 = vrot.slane %v378, 2
      %382 = vrot.lane.b32.xlu0 %v379, 112
      %v383 = vpop.permute.xlu0 %382
      %384 = vrot.lane.b32.xlu0 %v380, 112
      %v385 = vpop.permute.xlu0 %384
      %386 = vrot.lane.b32.xlu0 %v381, 112
      %v387 = vpop.permute.xlu0 %386
      %vm388 = vcmask 916480
      %v389 = vsel %vm388, %v383, %v385
      %v390 = vsel %vm388, %v385, %v387
      %391 = vst [vmem:[#allocation1] ss:$4 sm:$0xff] %v253
      %v392 = vld.sshfl [vmem:[#allocation1] sm:$0xff pattern:$0x73625140]
      %v394 = vld.sshfl [vmem:[#allocation1 + $0x8] sm:$0xff pattern:$0x73625140]
      %v396 = vld.sshfl [vmem:[#allocation1 + $0x10] sm:$0xff pattern:$0x73625140]
      %398 = vrot.lane.b32.xlu0 %v392, 111
      %v399 = vpop.permute.xlu0 %398
      %400 = vrot.lane.b32.xlu0 %v394, 111
      %v401 = vpop.permute.xlu0 %400
      %402 = vrot.lane.b32.xlu0 %v396, 111
      %v403 = vpop.permute.xlu0 %402
      %vm404 = vcmask 908288
      %v405 = vsel %vm404, %v399, %v401
      %v406 = vsel %vm404, %v401, %v403
      %v407 = vrot.slane %v364, 6
      %v408 = vrot.slane %v365, 6
      %v409 = vrot.slane %v366, 6
      %410 = vrot.lane.b32.xlu0 %v407, 110
      %v411 = vpop.permute.xlu0 %410
      %412 = vrot.lane.b32.xlu0 %v408, 110
      %v413 = vpop.permute.xlu0 %412
      %414 = vrot.lane.b32.xlu0 %v409, 110
      %v415 = vpop.permute.xlu0 %414
      %vm416 = vcmask 900096
      %v417 = vsel %vm416, %v411, %v413
      %v418 = vsel %vm416, %v413, %v415
      %419 = vrot.lane.b32.xlu0 %v339, 96
      %v420 = vpop.permute.xlu0 %419
      %421 = vrot.lane.b32.xlu0 %v340, 96
      %v422 = vpop.permute.xlu0 %421
      %423 = vrot.lane.b32.xlu0 %v378, 96
      %v424 = vpop.permute.xlu0 %423
      %vm425 = vcmask 785408
      %v426 = vsel %vm425, %v420, %v422
      %v427 = vsel %vm425, %v422, %v424
      %s428 = scalar_lea.vmem [#allocation1], 3
      %429 = vst [vmem:[%s428] ss:$4 sm:$0xff] %v253
      %v430 = vld.sshfl [vmem:[#allocation1] sm:$0xff pattern:$0x73625140]
      %v432 = vld.sshfl [vmem:[#allocation1 + $0x8] sm:$0xff pattern:$0x73625140]
      %v434 = vld.sshfl [vmem:[#allocation1 + $0x10] sm:$0xff pattern:$0x73625140]
      %436 = vrot.lane.b32.xlu0 %v430, 95
      %v437 = vpop.permute.xlu0 %436
      %438 = vrot.lane.b32.xlu0 %v432, 95
      %v439 = vpop.permute.xlu0 %438
      %440 = vrot.lane.b32.xlu0 %v434, 95
      %v441 = vpop.permute.xlu0 %440
      %vm442 = vcmask 777216
      %v443 = vsel %vm442, %v437, %v439
      %v444 = vsel %vm442, %v439, %v441
      %445 = vrot.lane.b32.xlu0 %v364, 94
      %v446 = vpop.permute.xlu0 %445
      %447 = vrot.lane.b32.xlu0 %v365, 94
      %v448 = vpop.permute.xlu0 %447
      %449 = vrot.lane.b32.xlu0 %v366, 94
      %v450 = vpop.permute.xlu0 %449
      %vm451 = vcmask 769024
      %v452 = vsel %vm451, %v446, %v448
      %v453 = vsel %vm451, %v448, %v450
      %vm454 = vcmask 1041408
      %v457 = vsel %vm454, %v339, %v357
      %v460 = vsel %vm454, %v340, %v358
      %v462 = vsel %vm277, %v457, %v374
      %v464 = vsel %vm277, %v460, %v375
      %vm465 = vcmask 1045504
      %v467 = vsel %vm465, %v462, %v389
      %v470 = vsel %vm465, %v464, %v390
      %v474 = vsel %vm454, %v405, %v417
      %v477 = vsel %vm454, %v406, %v418
      %v479 = vsel %vm277, %v474, %v426
      %v481 = vsel %vm277, %v477, %v427
      %v483 = vsel %vm465, %v479, %v443
      %v486 = vsel %vm465, %v481, %v444
      %v488 = vld [vmem:[%s2] sm:$0xf]
      %v489 = vld [vmem:[%s2 + $0x4] sm:$0xf]
      %v490 = vld [vmem:[%s3] sm:$0xff]
      %v491 = vld [vmem:[%s3 + $0x8] sm:$0xff]
      %493 = vset.pattern.permute.xlu0 0
      %494 = vperm.xlu0 %493, %v490
      %v495 = vpop.permute.xlu0 %494
      %498 = vset.pattern.permute.xlu0 0
      %499 = vperm.xlu0 %498, %v491
      %v500 = vpop.permute.xlu0 %499
      %v504 = vunpack.c.l.b16 %v488
      %v505 = vunpack.c.l.b16 %v489
      %v506 = vpack.c.b16 %v505, %v504
      %vm507 = vcmask 293888
      %v509 = vsel %vm507, %v506, 0
      %v512 = vsel %vm454, %v452, 0
      %v515 = vsel %vm454, %v453, 0
      %517 = vmatpush.bf16.msra.mxu0 0
      %518 = vmatpush.bf16.msra.mxu0 0
      %519 = vmatpush.bf16.msra.mxu0 0
      %520 = vmatpush.bf16.msra.mxu0 0
      %521 = vmatpush.bf16.msra.mxu0 0
      %522 = vmatpush.bf16.msra.mxu0 %v512
      %523 = vmatpush.bf16.msra.mxu0 %v483
      %524 = vmatpush.bf16.msra.mxu0 %v467
      %525 = vmatmul.bf16.gmra.mxu0 %v509
      %v526 = vpop.f32.mrf.mxu0
      %v527 = vadd.f32 %v495, %v526
      %v528 = vpop.f32.mrf.mxu0
      %v529 = vadd.f32 %v500, %v528
      %530 = vdwg.mxu0
      %531 = vmatpush.bf16.msra.mxu0 0
      %532 = vmatpush.bf16.msra.mxu0 0
      %533 = vmatpush.bf16.msra.mxu0 0
      %534 = vmatpush.bf16.msra.mxu0 0
      %535 = vmatpush.bf16.msra.mxu0 0
      %536 = vmatpush.bf16.msra.mxu0 %v515
      %537 = vmatpush.bf16.msra.mxu0 %v486
      %538 = vmatpush.bf16.msra.mxu0 %v470
      %539 = vmatmul.bf16.gmra.mxu0 %v509
      %v540 = vpop.f32.mrf.mxu0
      %v541 = vadd.f32 %v495, %v540
      %v542 = vpop.f32.mrf.mxu0
      %v543 = vadd.f32 %v500, %v542
      %544 = vdwg.mxu0
      %v545 = vmax.f32 %v527, 0.0
      %v546 = vmax.f32 %v541, 0.0
      %v547 = vmax.f32 %v529, 0.0
      %v548 = vmax.f32 %v543, 0.0
      %v549 = vld [vmem:[%s4] sm:$0xf]
      %v550 = vpack.c.bf16 %v547, %v545
      %v551 = vpack.c.bf16 %v548, %v546
      %v552 = vld [vmem:[%s5] sm:$0xff]
      %554 = vset.pattern.permute.xlu0 0
      %555 = vperm.xlu0 %554, %v552
      %v556 = vpop.permute.xlu0 %555
      %vm558 = vcmask 130048
      %v560 = vsel %vm558, %v549, 0
      %562 = vmatpush.bf16.msra.mxu0 0
      %563 = vmatpush.bf16.msra.mxu0 0
      %564 = vmatpush.bf16.msra.mxu0 0
      %565 = vmatpush.bf16.msra.mxu0 0
      %566 = vmatpush.bf16.msra.mxu0 0
      %567 = vmatpush.bf16.msra.mxu0 0
      %568 = vmatpush.bf16.msra.mxu0 0
      %569 = vmatpush.bf16.msra.mxu0 %v550
      %570 = vmatmul.bf16.gmra.mxu0 %v560
      %v571 = vpop.f32.mrf.mxu0
      %v572 = vadd.f32 %v556, %v571
      %v573 = vpop.f32.mrf.mxu0
      %574 = vdwg.mxu0
      %575 = vmatpush.bf16.msra.mxu0 0
      %576 = vmatpush.bf16.msra.mxu0 0
      %577 = vmatpush.bf16.msra.mxu0 0
      %578 = vmatpush.bf16.msra.mxu0 0
      %579 = vmatpush.bf16.msra.mxu0 0
      %580 = vmatpush.bf16.msra.mxu0 0
      %581 = vmatpush.bf16.msra.mxu0 0
      %582 = vmatpush.bf16.msra.mxu0 %v551
      %583 = vmatmul.bf16.gmra.mxu0 %v560
      %v584 = vpop.f32.mrf.mxu0
      %v585 = vadd.f32 %v556, %v584
      %v586 = vpop.f32.mrf.mxu0
      %587 = vdwg.mxu0
      %v588 = vmax.f32 %v572, 0.0
      %v589 = vmax.f32 %v585, 0.0
      %v590 = vpack.c.bf16 %v589, %v588
      %591 = vst [vmem:[%s251] sm:$0xff] %v590
      %p592 = scmp.lt.s32.totalorder %s17, 1
      %s593 = scalar_select %p592, %s17, 1
      %s594 = smul.addr %s593, 2
      %s595 = smul.addr %s594, 4
      %s596 = scalar_lea.vmem %s6, %s595
      // Predicated region
      $region45: #{_fused_forward.1} parent=43 // pred_check
        %p597 = pneg %p166
      $region46: #{_fused_forward.1} parent=43 // pred_check_branch
        %599 = sbr.rel (%p597) target = $region48
      $region47: #{_fused_forward.1} parent=43 // pred_region
        _
      $region48: #{_fused_forward.1} parent=43 // pred_fallthru
        _
    $region44: #{_fused_forward.1} parent=5 // pred_fallthru
      _
    %p600 = scmp.le.s32.totalorder 2, %s12
    // Predicated region
    $region49: #{_fused_forward.1} parent=5 // pred_check
      %p601 = pneg %p600
    $region50: #{_fused_forward.1} parent=5 // pred_check_branch
      %603 = sbr.rel (%p601) target = $region52
    $region51: #{_fused_forward.1} parent=5 // pred_region
      %s604 = ssub.s32 %s12, 2
      // Predicated region
      $region53: #{_fused_forward.1} parent=51 // pred_check
        %p605 = pneg %p172
      $region54: #{_fused_forward.1} parent=51 // pred_check_branch
        %607 = sbr.rel (%p605) target = $region56
      $region55: #{_fused_forward.1} parent=51 // pred_region
        %p608 = scmp.lt.s32.totalorder %s18, 1
        %s609 = scalar_select %p608, %s18, 1
        %s610 = smul.addr %s609, 2
        %s611 = smul.addr %s610, 4
        %s612 = scalar_lea.vmem %s6, %s611
      $region56: #{_fused_forward.1} parent=51 // pred_fallthru
        _
    $region52: #{_fused_forward.1} parent=5 // pred_fallthru
      _
  $region6: #{_fused_forward.1} parent=0 // loop_footer
    %s16 = sadd.s32 1, %s12
  $region7: #{_fused_forward.1} parent=0 // loop_footer_branch
    %11 = sbr.rel target = $region3
  $region8: #{_fused_forward.1} parent=0 // loop_exit
    _

</llo_original>
